<compile_context>
chip_gen: v7x
topology: tpu7x:2x2x1
jax: 0.10.0
libtpu: 0.0.40
codegen_flags: <defaults>
</compile_context>

<pallas_src>
import functools

import jax
import jax.numpy as jnp
from jax.experimental import pallas as pl
from jax.experimental.pallas import tpu as pltpu


def _round_up(x: int, m: int) -> int:
    return (x + m - 1) // m * m


def _pad2d(a, rows, cols):
    pr = rows - a.shape[0]
    pc = cols - a.shape[1]
    if pr or pc:
        a = jnp.pad(a, ((0, pr), (0, pc)))
    return a


def _vmem_capacity_bytes() -> int:
    """Physical VMEM per TensorCore; conservative 64 MiB fallback."""
    try:
        info = pltpu.get_tpu_info()
        cap = getattr(info, "vmem_capacity_bytes", None)
        if cap:
            return int(cap)
    except Exception:  # hardware query only; never affects correctness
        pass
    return 64 << 20


# ----------------------------------------------------------------------------
# Kernels
# ----------------------------------------------------------------------------
def _ffn_kernel_resident(x_ref, w1_ref, b1_ref, w2_ref, b2_ref, *rest,
                         share_identity: bool, add_identity: bool,
                         compute_dtype):
    """Grid = (row_tiles,). Full W1/W2 resident in VMEM, no accumulator."""
    if add_identity and not share_identity:
        id_ref, o_ref = rest
    else:
        (o_ref,) = rest
        id_ref = None

    x = x_ref[...]
    h = jnp.dot(x.astype(compute_dtype), w1_ref[...],
                preferred_element_type=jnp.float32)
    h = jnp.maximum(h + b1_ref[...], 0.0)
    # NOTE: h is down-cast to compute_dtype (e.g. bf16) for the second MXU
    # matmul; accumulation stays f32.
    out = jnp.dot(h.astype(compute_dtype), w2_ref[...],
                  preferred_element_type=jnp.float32) + b2_ref[...]
    if add_identity:
        if share_identity:
            out = out + x.astype(jnp.float32)        # residual at x precision
        else:
            out = out + id_ref[...].astype(jnp.float32)
    o_ref[...] = out.astype(o_ref.dtype)


def _ffn_kernel_ktiled(x_ref, w1_ref, b1_ref, w2_ref, b2_ref, *rest,
                       share_identity: bool, add_identity: bool,
                       compute_dtype):
    """Grid = (row_tiles, ff_tiles). ff axis is a reduction into acc_ref."""
    if add_identity and not share_identity:
        id_ref, o_ref, acc_ref = rest
    else:
        o_ref, acc_ref = rest
        id_ref = None

    j = pl.program_id(1)

    @pl.when(j == 0)
    def _init():
        acc_ref[...] = jnp.zeros_like(acc_ref)

    h = jnp.dot(x_ref[...].astype(compute_dtype), w1_ref[...],
                preferred_element_type=jnp.float32)
    h = jnp.maximum(h + b1_ref[...], 0.0)
    acc_ref[...] += jnp.dot(h.astype(compute_dtype), w2_ref[...],
                            preferred_element_type=jnp.float32)

    @pl.when(j == pl.num_programs(1) - 1)
    def _finalize():
        out = acc_ref[...] + b2_ref[...]
        if add_identity:
            if share_identity:
                out = out + x_ref[...].astype(jnp.float32)
            else:
                out = out + id_ref[...].astype(jnp.float32)
        o_ref[...] = out.astype(o_ref.dtype)


# ----------------------------------------------------------------------------
# Wrapper
# ----------------------------------------------------------------------------
def ffn_pallas(x, w1, b1, w2, b2, identity=None, *, add_identity=True,
               tile_n=None, tile_k=None, compute_dtype=None):
    """x: (..., embed_dim). w1:(embed,ff), w2:(ff,out) (already transposed vs
    nn.Linear weights). Returns (..., out_dim). ffn_drop == 0.0 -> omitted."""
    embed_dim = x.shape[-1]
    ff_dim = w1.shape[1]
    out_dim = w2.shape[1]
    assert w1.shape == (embed_dim, ff_dim)
    assert w2.shape == (ff_dim, out_dim)
    assert b1.shape == (ff_dim,) and b2.shape == (out_dim,)

    out_dtype = x.dtype
    if compute_dtype is None:
        # bf16 MXU matmuls by default on floating inputs (f32 accumulation).
        compute_dtype = (jnp.bfloat16
                         if jnp.dtype(x.dtype) in (jnp.dtype(jnp.float32),
                                                   jnp.dtype(jnp.bfloat16))
                         else x.dtype)
    compute_dtype = jnp.dtype(compute_dtype)
    itemsize = compute_dtype.itemsize
    x_isz = jnp.dtype(x.dtype).itemsize
    out_isz = jnp.dtype(out_dtype).itemsize

    lead_shape = x.shape[:-1]
    n = 1
    for d in lead_shape:
        n *= d

    share_identity = bool(add_identity) and identity is None
    if share_identity and out_dim != embed_dim:
        raise ValueError("identity=None requires out_dim == embed_dim")
    if add_identity and identity is not None:
        assert identity.shape == (*lead_shape, out_dim)

    # ---- padded feature dims (lane-dense multiples of 128) -------------------
    embed_pad = _round_up(embed_dim, 128)
    ff_pad = _round_up(ff_dim, 128)
    out_pad = _round_up(out_dim, 128)

    vmem_capacity = _vmem_capacity_bytes()

    # ---- ff (K) tiling decision ----------------------------------------------
    if tile_k is None:
        tile_k = ff_pad
        # Resident-weight budget ~ half of real VMEM (128 MiB v5e/v6e -> ~64
        # MiB of weights allowed; 64 MiB v7x -> ~32 MiB).  The budget check
        # also charges a nominal 256-row f32 h intermediate so huge ff dims on
        # small-VMEM parts fall back to K-tiling.
        budget = vmem_capacity // 2
        while (((embed_pad + out_pad) * tile_k * itemsize + 256 * tile_k * 4)
               > budget and tile_k // 2 >= 256 and (tile_k // 2) % 128 == 0):
            tile_k //= 2
    assert tile_k % 128 == 0 and ff_pad % tile_k == 0
    k_tiles = ff_pad // tile_k
    resident_weights = (k_tiles == 1)

    # ---- row (N) tiling -------------------------------------------------------
    user_tile_n = tile_n is not None
    if tile_n is None:
        # Larger row tiles on the streamed path amortize per-row-tile weight
        # re-streaming (total weight HBM traffic = n_tiles * (W1+W2) bytes).
        base = 256 if resident_weights else 512
        tile_n = min(base, _round_up(max(n, 1), 8))
    tile_n = _round_up(tile_n, 8)
    n_pad = _round_up(max(n, 1), tile_n)
    n_tiles = n_pad // tile_n
    # Guarantee >= 2 row tiles when possible so the "parallel" axis can shard
    # across the 2 TensorCores on v7x (harmless ~0.35us extra step elsewhere).
    if (not user_tile_n) and n_tiles == 1 and tile_n > 8 and n > 8:
        tile_n = _round_up((tile_n + 1) // 2, 8)
        n_pad = _round_up(n, tile_n)
        n_tiles = n_pad // tile_n

    # ---- VMEM accounting (streamed weights counted 2x: double-buffered) ------
    id_isz = (jnp.dtype(identity.dtype).itemsize
              if (add_identity and identity is not None) else 0)

    def _vmem_needed(tn):
        w_buf = 1 if resident_weights else 2
        need = w_buf * ((embed_pad * tile_k + tile_k * out_pad) * itemsize
                        + (tile_k + out_pad) * 4)          # weights + biases
        need += 2 * tn * embed_pad * x_isz                  # x tiles
        need += 2 * tn * out_pad * out_isz                  # out tiles
        need += tn * tile_k * 4                             # h intermediate
        need += tn * out_pad * 4                            # f32 result/acc
        if add_identity and not share_identity:
            need += 2 * tn * out_pad * id_isz               # identity tiles
        return need

    while tile_n > 8 and _vmem_needed(tile_n) > int(0.85 * vmem_capacity):
        tile_n = max(8, _round_up(tile_n // 2, 8))
        n_pad = _round_up(max(n, 1), tile_n)
        n_tiles = n_pad // tile_n

    vmem_limit = int(min(int(0.9 * vmem_capacity),
                         max(32 << 20, int(_vmem_needed(tile_n) * 1.3))))

    # ---- prepare operands -----------------------------------------------------
    # NOTE: the weight cast/pad is a pure function of the parameters; in a real
    # deployment it would be done once at init time, not per forward call.
    x2 = _pad2d(x.reshape(n, embed_dim), n_pad, embed_pad)            # orig dtype
    w1p = _pad2d(w1.astype(compute_dtype), embed_pad, ff_pad)
    w2p = _pad2d(w2.astype(compute_dtype), ff_pad, out_pad)
    b1p = _pad2d(b1.astype(jnp.float32).reshape(1, ff_dim), 1, ff_pad)
    b2p = _pad2d(b2.astype(jnp.float32).reshape(1, out_dim), 1, out_pad)

    inputs = [x2, w1p, b1p, w2p, b2p]
    if add_identity and not share_identity:
        inputs.append(_pad2d(identity.reshape(n, out_dim), n_pad, out_pad))

    # ---- cost estimate --------------------------------------------------------
    flops = 2 * n * embed_dim * ff_dim + 2 * n * ff_dim * out_dim
    w_bytes = (w1p.size + w2p.size) * itemsize + (b1p.size + b2p.size) * 4
    bytes_accessed = (x2.size * x_isz
                      + (1 if resident_weights else n_tiles) * w_bytes
                      + n_pad * out_pad * out_isz)
    if add_identity and not share_identity:
        bytes_accessed += n_pad * out_pad * id_isz
    cost = pl.CostEstimate(flops=int(flops), transcendentals=0,
                           bytes_accessed=int(bytes_accessed))

    # ---- build & call ---------------------------------------------------------
    def _call(single_buffer_weights: bool):
        wkw = (dict(pipeline_mode=pl.Buffered(1))
               if single_buffer_weights else {})
        if resident_weights:
            kernel = functools.partial(
                _ffn_kernel_resident, share_identity=share_identity,
                add_identity=bool(add_identity), compute_dtype=compute_dtype)
            grid = (n_tiles,)
            in_specs = [
                pl.BlockSpec((tile_n, embed_pad), lambda i: (i, 0)),         # x
                pl.BlockSpec((embed_pad, ff_pad), lambda i: (0, 0), **wkw),  # W1
                pl.BlockSpec((1, ff_pad),         lambda i: (0, 0), **wkw),  # b1
                pl.BlockSpec((ff_pad, out_pad),   lambda i: (0, 0), **wkw),  # W2
                pl.BlockSpec((1, out_pad),        lambda i: (0, 0), **wkw),  # b2
            ]
            if add_identity and not share_identity:
                in_specs.append(pl.BlockSpec((tile_n, out_pad),
                                             lambda i: (i, 0)))
            out_specs = pl.BlockSpec((tile_n, out_pad), lambda i: (i, 0))
            scratch = ()
            dims = ("parallel",)
        else:
            kernel = functools.partial(
                _ffn_kernel_ktiled, share_identity=share_identity,
                add_identity=bool(add_identity), compute_dtype=compute_dtype)
            grid = (n_tiles, k_tiles)
            in_specs = [
                pl.BlockSpec((tile_n, embed_pad), lambda i, j: (i, 0)),      # x
                pl.BlockSpec((embed_pad, tile_k), lambda i, j: (0, j)),      # W1
                pl.BlockSpec((1, tile_k),         lambda i, j: (0, j)),      # b1
                pl.BlockSpec((tile_k, out_pad),   lambda i, j: (j, 0)),      # W2
                pl.BlockSpec((1, out_pad),        lambda i, j: (0, 0)),      # b2
            ]
            if add_identity and not share_identity:
                in_specs.append(pl.BlockSpec((tile_n, out_pad),
                                             lambda i, j: (i, 0)))
            out_specs = pl.BlockSpec((tile_n, out_pad), lambda i, j: (i, 0))
            scratch = (pltpu.VMEM((tile_n, out_pad), jnp.float32),)
            dims = ("parallel", "arbitrary")

        return pl.pallas_call(
            kernel,
            out_shape=jax.ShapeDtypeStruct((n_pad, out_pad), out_dtype),
            grid_spec=pltpu.PrefetchScalarGridSpec(
                num_scalar_prefetch=0,
                grid=grid,
                in_specs=in_specs,
                out_specs=out_specs,
                scratch_shapes=scratch,
            ),
            compiler_params=pltpu.CompilerParams(
                dimension_semantics=dims,
                vmem_limit_bytes=vmem_limit),
            cost_estimate=cost,
        )(*inputs)

    if resident_weights:
        try:
            out = _call(True)        # single-buffered resident weights
        except (pltpu.LoweringException, NotImplementedError,
                ValueError, TypeError):
            out = _call(False)       # targeted fallback only
    else:
        out = _call(False)           # streamed K-tiles: keep double-buffering

    out = out[:n, :out_dim]
    return out.reshape(*lead_shape, out_dim)


def ffn_reference(x, w1, b1, w2, b2, identity=None, add_identity=True):
    h = jnp.maximum(x @ w1 + b1, 0.0)
    out = h @ w2 + b2
    if not add_identity:
        return out
    if identity is None:
        identity = x
    return identity + out


if __name__ == "__main__":
    # Small shapes consistent with the module: batch=2, seq=8, embed=32, ff=64.
    batch, seq = 2, 8
    embed_dim, feedforward_dim = 32, 64
    output_dim = embed_dim  # default: output_dim = embed_dim

    key = jax.random.PRNGKey(0)
    kx, kw1, kb1, kw2, kb2, kid = jax.random.split(key, 6)

    x = jax.random.normal(kx, (batch, seq, embed_dim), dtype=jnp.float32)
    w1 = jax.random.normal(kw1, (embed_dim, feedforward_dim), jnp.float32) * 0.05
    b1 = jax.random.normal(kb1, (feedforward_dim,), jnp.float32) * 0.01
    w2 = jax.random.normal(kw2, (feedforward_dim, output_dim), jnp.float32) * 0.05
    b2 = jax.random.normal(kb2, (output_dim,), jnp.float32) * 0.01

    # 1) Default path: bf16 MXU compute, shared identity (added at x precision),
    #    resident single-buffered weights, specialized (no-accumulator) kernel.
    out = jax.block_until_ready(ffn_pallas(x, w1, b1, w2, b2))
    ref = ffn_reference(x, w1, b1, w2, b2)
    assert out.shape == (batch, seq, output_dim)
    assert jnp.allclose(out, ref, atol=3e-2, rtol=3e-2)

    # 2) Exact-precision path: f32 compute everywhere.
    out2 = jax.block_until_ready(
        ffn_pallas(x, w1, b1, w2, b2, compute_dtype=jnp.float32))
    assert jnp.allclose(out2, ref, atol=1e-4, rtol=1e-4)

    # 3) Explicit identity tensor + forced ff-axis (K) tiling (k_tiles=2 grid,
    #    accumulator path) in f32.
    ff2 = 256
    w1b = jax.random.normal(kw1, (embed_dim, ff2), jnp.float32) * 0.05
    b1b = jax.random.normal(kb1, (ff2,), jnp.float32) * 0.01
    w2b = jax.random.normal(kw2, (ff2, output_dim), jnp.float32) * 0.05
    ident = jax.random.normal(kid, (batch, seq, output_dim), dtype=jnp.float32)
    out3 = jax.block_until_ready(
        ffn_pallas(x, w1b, b1b, w2b, b2, identity=ident,
                   tile_n=8, tile_k=128, compute_dtype=jnp.float32))
    ref3 = ffn_reference(x, w1b, b1b, w2b, b2, identity=ident)
    assert jnp.allclose(out3, ref3, atol=1e-4, rtol=1e-4)

    # 4) No-identity path (add_identity=False), default bf16 compute.
    out4 = jax.block_until_ready(
        ffn_pallas(x, w1, b1, w2, b2, add_identity=False))
    ref4 = ffn_reference(x, w1, b1, w2, b2, add_identity=False)
    assert jnp.allclose(out4, ref4, atol=2e-2, rtol=2e-2)

    print("KERNEL_OK")
</pallas_src>

<mosaic_0001>
module attributes {stable_mosaic.version = 11 : i64} {
  func.func @_ffn_kernel_resident(%arg0: i32, %arg1: memref<8x128xf32, #tpu.memory_space<vmem>>, %arg2: memref<128x128xbf16, #tpu.memory_space<vmem>>, %arg3: memref<1x128xf32, #tpu.memory_space<vmem>>, %arg4: memref<128x128xbf16, #tpu.memory_space<vmem>>, %arg5: memref<1x128xf32, #tpu.memory_space<vmem>>, %arg6: memref<8x128xf32, #tpu.memory_space<vmem>>) attributes {dimension_semantics = [#tpu.dimension_semantics<parallel>], iteration_bounds = array<i64: 2>, scalar_prefetch = 0 : i64, scratch_operands = 0 : i64, tpu.core_type = #tpu.core_type<tc>, window_params = [{transform_indices = @transform_0, window_bounds = array<i64: 8, 128>}, {pipeline_mode = #tpu.pipeline_mode<synchronous>, transform_indices = @transform_1, window_bounds = array<i64: 128, 128>}, {pipeline_mode = #tpu.pipeline_mode<synchronous>, transform_indices = @transform_2, window_bounds = array<i64: 1, 128>}, {pipeline_mode = #tpu.pipeline_mode<synchronous>, transform_indices = @transform_3, window_bounds = array<i64: 128, 128>}, {pipeline_mode = #tpu.pipeline_mode<synchronous>, transform_indices = @transform_4, window_bounds = array<i64: 1, 128>}, {transform_indices = @transform_5, window_bounds = array<i64: 8, 128>}]} {
    %c0 = arith.constant 0 : index
    %c0_0 = arith.constant 0 : index
    %0 = vector.load %arg1[%c0, %c0_0] : memref<8x128xf32, #tpu.memory_space<vmem>>, vector<8x128xf32>
    %1 = arith.truncf %0 : vector<8x128xf32> to vector<8x128xbf16>
    %c0_1 = arith.constant 0 : index
    %c0_2 = arith.constant 0 : index
    %2 = vector.load %arg2[%c0_1, %c0_2] : memref<128x128xbf16, #tpu.memory_space<vmem>>, vector<128x128xbf16>
    %cst = arith.constant dense<0.000000e+00> : vector<8x128xf32>
    %3 = tpu.matmul %1, %2, %cst {dimension_numbers = #tpu.dot_dimension_numbers<[1], [0], [0], [1], [0, 0, 1, 1], [], []>} : vector<8x128xbf16>, vector<128x128xbf16>, vector<8x128xf32> -> vector<8x128xf32>
    %c0_3 = arith.constant 0 : index
    %c0_4 = arith.constant 0 : index
    %4 = vector.load %arg3[%c0_3, %c0_4] : memref<1x128xf32, #tpu.memory_space<vmem>>, vector<1x128xf32>
    %5 = vector.broadcast %4 : vector<1x128xf32> to vector<8x128xf32>
    %6 = arith.addf %3, %5 : vector<8x128xf32>
    %cst_5 = arith.constant 0.000000e+00 : f32
    %7 = vector.broadcast %cst_5 : f32 to vector<8x128xf32>
    %8 = arith.maximumf %6, %7 : vector<8x128xf32>
    %9 = arith.truncf %8 : vector<8x128xf32> to vector<8x128xbf16>
    %c0_6 = arith.constant 0 : index
    %c0_7 = arith.constant 0 : index
    %10 = vector.load %arg4[%c0_6, %c0_7] : memref<128x128xbf16, #tpu.memory_space<vmem>>, vector<128x128xbf16>
    %cst_8 = arith.constant dense<0.000000e+00> : vector<8x128xf32>
    %11 = tpu.matmul %9, %10, %cst_8 {dimension_numbers = #tpu.dot_dimension_numbers<[1], [0], [0], [1], [0, 0, 1, 1], [], []>} : vector<8x128xbf16>, vector<128x128xbf16>, vector<8x128xf32> -> vector<8x128xf32>
    %c0_9 = arith.constant 0 : index
    %c0_10 = arith.constant 0 : index
    %12 = vector.load %arg5[%c0_9, %c0_10] : memref<1x128xf32, #tpu.memory_space<vmem>>, vector<1x128xf32>
    %13 = vector.broadcast %12 : vector<1x128xf32> to vector<8x128xf32>
    %14 = arith.addf %11, %13 : vector<8x128xf32>
    %15 = arith.addf %14, %0 : vector<8x128xf32>
    %c0_11 = arith.constant 0 : index
    %c0_12 = arith.constant 0 : index
    %16 = vector.load %arg6[%c0_11, %c0_12] : memref<8x128xf32, #tpu.memory_space<vmem>>, vector<8x128xf32>
    tpu.vector_store %arg6[%c0_11, %c0_12], %15 {strides = array<i32>} : memref<8x128xf32, #tpu.memory_space<vmem>>, vector<8x128xf32>,
    return
  }
  func.func @transform_0(%arg0: i32) -> (i32, i32) {
    %c0_i32 = arith.constant 0 : i32
    %c0_i32_0 = arith.constant 0 : i32
    return %arg0, %c0_i32 : i32, i32
  }
  func.func @transform_1(%arg0: i32) -> (i32, i32) {
    %c0_i32 = arith.constant 0 : i32
    %c0_i32_0 = arith.constant 0 : i32
    %c0_i32_1 = arith.constant 0 : i32
    return %c0_i32, %c0_i32_0 : i32, i32
  }
  func.func @transform_2(%arg0: i32) -> (i32, i32) {
    %c0_i32 = arith.constant 0 : i32
    %c0_i32_0 = arith.constant 0 : i32
    %c0_i32_1 = arith.constant 0 : i32
    return %c0_i32, %c0_i32_0 : i32, i32
  }
  func.func @transform_3(%arg0: i32) -> (i32, i32) {
    %c0_i32 = arith.constant 0 : i32
    %c0_i32_0 = arith.constant 0 : i32
    %c0_i32_1 = arith.constant 0 : i32
    return %c0_i32, %c0_i32_0 : i32, i32
  }
  func.func @transform_4(%arg0: i32) -> (i32, i32) {
    %c0_i32 = arith.constant 0 : i32
    %c0_i32_0 = arith.constant 0 : i32
    %c0_i32_1 = arith.constant 0 : i32
    return %c0_i32, %c0_i32_0 : i32, i32
  }
  func.func @transform_5(%arg0: i32) -> (i32, i32) {
    %c0_i32 = arith.constant 0 : i32
    %c0_i32_0 = arith.constant 0 : i32
    return %arg0, %c0_i32 : i32, i32
  }
}

</mosaic_0001>

<llo_original>
// kernel: tpu_custom_call.1
$region0: #{tpu_custom_call.1}
  #allocation0 [shape = 'u32[]', space=smem, size = 0x4, offset = 0x4, fixed_abs, tag = 'smem constant byte address 0x4 - core index']
  #allocation1 [shape = 'u32[144,128]{1,0:T(1,128)}', space=vmem, size = 0x12000, scoped, tag = 'internal scratch']
  %s0 = inlined_call_operand.hbm [shape: f32[16,128], index: 0, kind: input, shape index: {}]
  %s1 = inlined_call_operand.hbm [shape: bf16[128,128], index: 1, kind: input, shape index: {}]
  %s2 = inlined_call_operand.vmem [shape: f32[1,128], index: 2, kind: input, shape index: {}]
  %s3 = inlined_call_operand.hbm [shape: bf16[128,128], index: 3, kind: input, shape index: {}]
  %s4 = inlined_call_operand.vmem [shape: f32[1,128], index: 4, kind: input, shape index: {}]
  %s5 = inlined_call_operand.hbm [shape: f32[16,128], index: 5, kind: output, shape index: {}]
  %s6 = sld [smem:[#allocation0]]
  $region65: #{tpu_custom_call.1} parent=0
    _
  %s8 = ssub.s32 1, %s6
  %s9 = scalar_select 0, %s8, %s6
  $region1: #{tpu_custom_call.1} parent=0
    #allocation2 [shape = 'u8[8192]{0}', space=vmem, size = 0x2000, scoped, tag = 'input window, operand 0']
    #allocation3 [shape = 's32[2]{0}', space=sflag, size = 0x8, scoped, tag = 'scoped memory for tpu_custom_call.1']
    #allocation4 [shape = 's32[2]{0}', space=sflag, size = 0x8, scoped, tag = 'scoped memory for tpu_custom_call.1']
    #allocation5 [shape = 'u8[32768]{0}', space=vmem, size = 0x8000, scoped, tag = 'input window, operand 1, single buffered']
    #allocation6 [shape = 's32[1]{0}', space=sflag, size = 0x4, scoped, tag = 'scoped memory for tpu_custom_call.1']
    #allocation7 [shape = 'u8[32768]{0}', space=vmem, size = 0x8000, scoped, tag = 'input window, operand 3, single buffered']
    #allocation8 [shape = 'u8[8192]{0}', space=vmem, size = 0x2000, scoped, tag = 'output window, operand 0']
    %10 = vsyncpa [#allocation3], 0
    %s11 = scalar_lea.sflag [#allocation3], 1
    %12 = vsyncpa %s11, 0
    %13 = vsyncpa [#allocation6], 0
    %14 = vsyncpa [#allocation4], 0
    %s15 = scalar_lea.sflag [#allocation4], 1
    %16 = vsyncpa %s15, 0
    loop: start=0, step=1, limit=4
    $region2: #{tpu_custom_call.1} parent=1 // loop_pre_header
      _
    $region3: #{tpu_custom_call.1} parent=1 // loop_header
      %s18 = sphi 0, %s22
      %p19 = scmp.ge.s32.totalorder %s18, 4
      %s28 = sphi 0, %s30
      %s31 = sphi 0, %s28
      %s32 = sphi 0, %s31
      %s48 = sphi 0, %s32
      %s52 = sphi 0, %s52
      %s54 = sphi 0, %s52
      %s55 = sphi 0, %s54
      %s69 = sphi 0, %s55
      %s73 = sphi 0, %s73
      %s75 = sphi 0, %s73
      %s76 = sphi 0, %s75
      %s90 = sphi 0, %s76
      %s94 = sphi 0, %s94
      %s96 = sphi 0, %s94
      %s97 = sphi 0, %s96
      %s111 = sphi 0, %s97
      %s115 = sphi 0, %s115
      %s117 = sphi 0, %s115
      %s118 = sphi 0, %s117
      %s132 = sphi 0, %s118
      %s138 = sphi 0, %s140
      %s141 = sphi 0, %s138
      %s142 = sphi 0, %s141
      %s158 = sphi 0, %s142
    $region4: #{tpu_custom_call.1} parent=1 // loop_header_branch
      %21 = sbr.rel (%p19) target = $region8
    $region5: #{tpu_custom_call.1} parent=1 // loop_body
      %s23 = ssub.s32 %s18, 1
      %s24 = ssub.s32 %s18, 2
      %s25 = sadd.s32 %s18, 1
      %s26 = ssub.s32 %s18, %s25
      %p27 = scmp.eq.s32.totalorder %s26, 0
      %s29 = sadd.s32 %s28, 1
      %s30 = scalar_select %p27, %s28, %s29
      %p33 = pneg %p27
      %p34 = scmp.eq.s32.totalorder %s18, 1
      %p35 = por %p33, %p34
      %p36 = scmp.ne.s32.totalorder %s28, %s31
      %p37 = scmp.eq.s32.totalorder %s18, 0
      %p38 = por %p36, %p37
      %p39 = scmp.ne.s32.totalorder %s28, %s31
      %p40 = scmp.eq.s32.totalorder %s23, 1
      %p41 = por %p39, %p40
      %p42 = scmp.ne.s32.totalorder %s31, %s32
      %p43 = scmp.eq.s32.totalorder %s23, 0
      %p44 = por %p42, %p43
      %p45 = scmp.ne.s32.totalorder %s31, %s32
      %p46 = scmp.eq.s32.totalorder %s24, 1
      %p47 = por %p45, %p46
      %p49 = scmp.ne.s32.totalorder %s32, %s48
      %p50 = scmp.eq.s32.totalorder %s24, 0
      %p51 = por %p49, %p50
      %s53 = sadd.s32 %s52, 1
      %p56 = scmp.eq.s32.totalorder %s18, 1
      %p57 = scmp.ne.s32.totalorder %s52, %s54
      %p58 = scmp.eq.s32.totalorder %s18, 0
      %p59 = por %p57, %p58
      %p60 = scmp.ne.s32.totalorder %s52, %s54
      %p61 = scmp.eq.s32.totalorder %s23, 1
      %p62 = por %p60, %p61
      %p63 = scmp.ne.s32.totalorder %s54, %s55
      %p64 = scmp.eq.s32.totalorder %s23, 0
      %p65 = por %p63, %p64
      %p66 = scmp.ne.s32.totalorder %s54, %s55
      %p67 = scmp.eq.s32.totalorder %s24, 1
      %p68 = por %p66, %p67
      %p70 = scmp.ne.s32.totalorder %s55, %s69
      %p71 = scmp.eq.s32.totalorder %s24, 0
      %p72 = por %p70, %p71
      %s74 = sadd.s32 %s73, 1
      %p77 = scmp.eq.s32.totalorder %s18, 1
      %p78 = scmp.ne.s32.totalorder %s73, %s75
      %p79 = scmp.eq.s32.totalorder %s18, 0
      %p80 = por %p78, %p79
      %p81 = scmp.ne.s32.totalorder %s73, %s75
      %p82 = scmp.eq.s32.totalorder %s23, 1
      %p83 = por %p81, %p82
      %p84 = scmp.ne.s32.totalorder %s75, %s76
      %p85 = scmp.eq.s32.totalorder %s23, 0
      %p86 = por %p84, %p85
      %p87 = scmp.ne.s32.totalorder %s75, %s76
      %p88 = scmp.eq.s32.totalorder %s24, 1
      %p89 = por %p87, %p88
      %p91 = scmp.ne.s32.totalorder %s76, %s90
      %p92 = scmp.eq.s32.totalorder %s24, 0
      %p93 = por %p91, %p92
      %s95 = sadd.s32 %s94, 1
      %p98 = scmp.eq.s32.totalorder %s18, 1
      %p99 = scmp.ne.s32.totalorder %s94, %s96
      %p100 = scmp.eq.s32.totalorder %s18, 0
      %p101 = por %p99, %p100
      %p102 = scmp.ne.s32.totalorder %s94, %s96
      %p103 = scmp.eq.s32.totalorder %s23, 1
      %p104 = por %p102, %p103
      %p105 = scmp.ne.s32.totalorder %s96, %s97
      %p106 = scmp.eq.s32.totalorder %s23, 0
      %p107 = por %p105, %p106
      %p108 = scmp.ne.s32.totalorder %s96, %s97
      %p109 = scmp.eq.s32.totalorder %s24, 1
      %p110 = por %p108, %p109
      %p112 = scmp.ne.s32.totalorder %s97, %s111
      %p113 = scmp.eq.s32.totalorder %s24, 0
      %p114 = por %p112, %p113
      %s116 = sadd.s32 %s115, 1
      %p119 = scmp.eq.s32.totalorder %s18, 1
      %p120 = scmp.ne.s32.totalorder %s115, %s117
      %p121 = scmp.eq.s32.totalorder %s18, 0
      %p122 = por %p120, %p121
      %p123 = scmp.ne.s32.totalorder %s115, %s117
      %p124 = scmp.eq.s32.totalorder %s23, 1
      %p125 = por %p123, %p124
      %p126 = scmp.ne.s32.totalorder %s117, %s118
      %p127 = scmp.eq.s32.totalorder %s23, 0
      %p128 = por %p126, %p127
      %p129 = scmp.ne.s32.totalorder %s117, %s118
      %p130 = scmp.eq.s32.totalorder %s24, 1
      %p131 = por %p129, %p130
      %p133 = scmp.ne.s32.totalorder %s118, %s132
      %p134 = scmp.eq.s32.totalorder %s24, 0
      %p135 = por %p133, %p134
      %s136 = ssub.s32 %s18, %s25
      %p137 = scmp.eq.s32.totalorder %s136, 0
      %s139 = sadd.s32 %s138, 1
      %s140 = scalar_select %p137, %s138, %s139
      %p143 = pneg %p137
      %p144 = scmp.eq.s32.totalorder %s18, 1
      %p145 = por %p143, %p144
      %p146 = scmp.ne.s32.totalorder %s138, %s141
      %p147 = scmp.eq.s32.totalorder %s18, 0
      %p148 = por %p146, %p147
      %p149 = scmp.ne.s32.totalorder %s138, %s141
      %p150 = scmp.eq.s32.totalorder %s23, 1
      %p151 = por %p149, %p150
      %p152 = scmp.ne.s32.totalorder %s141, %s142
      %p153 = scmp.eq.s32.totalorder %s23, 0
      %p154 = por %p152, %p153
      %p155 = scmp.ne.s32.totalorder %s141, %s142
      %p156 = scmp.eq.s32.totalorder %s24, 1
      %p157 = por %p155, %p156
      %p159 = scmp.ne.s32.totalorder %s142, %s158
      %p160 = scmp.eq.s32.totalorder %s24, 0
      %p161 = por %p159, %p160
      %p162 = scmp.le.s32.totalorder 1, %s18
      %p163 = scmp.lt.s32.totalorder %s18, 3
      %p164 = pnand %p162, %p163
      %p165 = pneg %p164
      // Predicated region
      $region9: #{tpu_custom_call.1} parent=5 // pred_check
        _
      $region10: #{tpu_custom_call.1} parent=5 // pred_check_branch
        %167 = sbr.rel (%p164) target = $region12
      $region11: #{tpu_custom_call.1} parent=5 // pred_region
        %s168 = ssub.s32 %s18, 1
        // Predicated region
        $region13: #{tpu_custom_call.1} parent=11 // pred_check
          %p169 = pneg %p65
        $region14: #{tpu_custom_call.1} parent=11 // pred_check_branch
          %171 = sbr.rel (%p169) target = $region16
        $region15: #{tpu_custom_call.1} parent=11 // pred_region
          %s173 = ssub.s32 1024, 1024
          %174 = vsyncadd [#allocation6], %s173
          %s175 = sshll.u32 [#allocation5], 4
          %s176 = int_to_ptr.vmem [resolvable:$true] %s175
          %181 = dma.hbm_to_vmem [thread:$0]  %s1, 1024, %s176, [#allocation6], 64, 64, 4
        $region16: #{tpu_custom_call.1} parent=11 // pred_fallthru
          _
        // Predicated region
        $region17: #{tpu_custom_call.1} parent=11 // pred_check
          %p182 = pneg %p86
        $region18: #{tpu_custom_call.1} parent=11 // pred_check_branch
          %184 = sbr.rel (%p182) target = $region20
        $region19: #{tpu_custom_call.1} parent=11 // pred_region
          _
        $region20: #{tpu_custom_call.1} parent=11 // pred_fallthru
          _
        // Predicated region
        $region21: #{tpu_custom_call.1} parent=11 // pred_check
          %p185 = pneg %p107
        $region22: #{tpu_custom_call.1} parent=11 // pred_check_branch
          %187 = sbr.rel (%p185) target = $region24
        $region23: #{tpu_custom_call.1} parent=11 // pred_region
          %s189 = ssub.s32 1024, 1024
          %190 = vsyncadd [#allocation6], %s189
          %s191 = sshll.u32 [#allocation7], 4
          %s192 = int_to_ptr.vmem [resolvable:$true] %s191
          %197 = dma.hbm_to_vmem [thread:$0]  %s3, 1024, %s192, [#allocation6], 64, 64, 4
        $region24: #{tpu_custom_call.1} parent=11 // pred_fallthru
          _
        // Predicated region
        $region25: #{tpu_custom_call.1} parent=11 // pred_check
          %p198 = pneg %p128
        $region26: #{tpu_custom_call.1} parent=11 // pred_check_branch
          %200 = sbr.rel (%p198) target = $region28
        $region27: #{tpu_custom_call.1} parent=11 // pred_region
          _
        $region28: #{tpu_custom_call.1} parent=11 // pred_fallthru
          _
      $region12: #{tpu_custom_call.1} parent=5 // pred_fallthru
        _
      %p201 = scmp.lt.s32.totalorder %s18, 2
      // Predicated region
      $region29: #{tpu_custom_call.1} parent=5 // pred_check
        %p202 = pneg %p201
      $region30: #{tpu_custom_call.1} parent=5 // pred_check_branch
        %204 = sbr.rel (%p202) target = $region32
      $region31: #{tpu_custom_call.1} parent=5 // pred_region
        // Predicated region
        $region33: #{tpu_custom_call.1} parent=31 // pred_check
          %p205 = pneg %p38
        $region34: #{tpu_custom_call.1} parent=31 // pred_check_branch
          %207 = sbr.rel (%p205) target = $region36
        $region35: #{tpu_custom_call.1} parent=31 // pred_region
          %s208 = sand.u32 %s28, 1
          %s209 = scalar_lea.sflag [#allocation3], %s208
          %s210 = sand.u32 %s28, 1
          %s211 = smul.addr %s210, 8
          %s212 = scalar_lea.vmem [#allocation2], %s211
          %s214 = ssub.s32 128, 128
          %215 = vsyncadd %s209, %s214
          %s216 = smul.addr %s18, 128
          %s217 = scalar_lea.hbm %s0, %s216
          %s219 = sshll.u32 %s212, 4
          %s220 = int_to_ptr.vmem [resolvable:$true] %s219
          %222 = dma.hbm_to_vmem [thread:$0]  %s217, 128, %s220, %s209
        $region36: #{tpu_custom_call.1} parent=31 // pred_fallthru
          _
      $region32: #{tpu_custom_call.1} parent=5 // pred_fallthru
        _
      %p223 = scmp.le.s32.totalorder 1, %s18
      %p224 = scmp.lt.s32.totalorder %s18, 3
      %p225 = pnand %p223, %p224
      %p226 = pneg %p225
      // Predicated region
      $region37: #{tpu_custom_call.1} parent=5 // pred_check
        _
      $region38: #{tpu_custom_call.1} parent=5 // pred_check_branch
        %228 = sbr.rel (%p225) target = $region40
      $region39: #{tpu_custom_call.1} parent=5 // pred_region
        %s229 = ssub.s32 %s18, 1
        %s230 = sand.u32 %s31, 1
        %s231 = scalar_lea.sflag [#allocation3], %s230
        %s232 = sand.u32 %s31, 1
        %s233 = smul.addr %s232, 8
        %s234 = scalar_lea.vmem [#allocation2], %s233
        // Predicated region
        $region41: #{tpu_custom_call.1} parent=39 // pred_check
          %p235 = pneg %p44
        $region42: #{tpu_custom_call.1} parent=39 // pred_check_branch
          %237 = sbr.rel (%p235) target = $region44
        $region43: #{tpu_custom_call.1} parent=39 // pred_region
          %238 = dma.done %s231, 128
        $region44: #{tpu_custom_call.1} parent=39 // pred_fallthru
          _
        // Predicated region
        $region45: #{tpu_custom_call.1} parent=39 // pred_check
          %p239 = pneg %p65
        $region46: #{tpu_custom_call.1} parent=39 // pred_check_branch
          %241 = sbr.rel (%p239) target = $region48
        $region47: #{tpu_custom_call.1} parent=39 // pred_region
          %242 = dma.done [#allocation6], 1024
        $region48: #{tpu_custom_call.1} parent=39 // pred_fallthru
          _
        // Predicated region
        $region49: #{tpu_custom_call.1} parent=39 // pred_check
          %p243 = pneg %p107
        $region50: #{tpu_custom_call.1} parent=39 // pred_check_branch
          %245 = sbr.rel (%p243) target = $region52
        $region51: #{tpu_custom_call.1} parent=39 // pred_region
          %246 = dma.done [#allocation6], 1024
        $region52: #{tpu_custom_call.1} parent=39 // pred_fallthru
          _
        %s247 = sand.u32 %s31, 1
        %s248 = scalar_lea.sflag [#allocation3], %s247
        %s249 = sand.u32 %s31, 1
        %s250 = smul.addr %s249, 8
        %s251 = scalar_lea.vmem [#allocation2], %s250
        %p252 = pneg %p44
        %p253 = pneg %p41
        %p254 = pneg %p65
        %p255 = pneg %p62
        %p256 = pneg %p86
        %p257 = pneg %p83
        %p258 = pneg %p107
        %p259 = pneg %p104
        %p260 = pneg %p128
        %p261 = pneg %p125
        %p262 = pneg %p154
        %p263 = pneg %p151
        %s264 = sand.u32 %s141, 1
        %s265 = scalar_lea.sflag [#allocation4], %s264
        %s266 = sand.u32 %s141, 1
        %s267 = smul.addr %s266, 8
        %s268 = scalar_lea.vmem [#allocation8], %s267
        %v270 = vld [vmem:[%s234] sm:$0xff]
        %v271 = vpack.c.bf16 %v270, %v270
        %v272 = vld [vmem:[#allocation5] sm:$0xf]
        %v273 = vld [vmem:[#allocation5 + $0x4] sm:$0xf]
        %v274 = vld [vmem:[#allocation5 + $0x8] sm:$0xf]
        %v275 = vld [vmem:[#allocation5 + $0xc] sm:$0xf]
        %v276 = vld [vmem:[#allocation5 + $0x10] sm:$0xf]
        %v277 = vld [vmem:[#allocation5 + $0x14] sm:$0xf]
        %v278 = vld [vmem:[#allocation5 + $0x18] sm:$0xf]
        %v279 = vld [vmem:[#allocation5 + $0x1c] sm:$0xf]
        %v280 = vld [vmem:[#allocation5 + $0x20] sm:$0xf]
        %v281 = vld [vmem:[#allocation5 + $0x24] sm:$0xf]
        %v282 = vld [vmem:[#allocation5 + $0x28] sm:$0xf]
        %v283 = vld [vmem:[#allocation5 + $0x2c] sm:$0xf]
        %v284 = vld [vmem:[#allocation5 + $0x30] sm:$0xf]
        %v285 = vld [vmem:[#allocation5 + $0x34] sm:$0xf]
        %v286 = vld [vmem:[#allocation5 + $0x38] sm:$0xf]
        %v287 = vld [vmem:[#allocation5 + $0x3c] sm:$0xf]
        %v288 = vld [vmem:[%s2] sm:$0x1]
        %v290 = vlaneseq
        %v291 = vshrl.u32 %v290, 7
        %v292 = vsub.s32 0, %v291
        %v293 = vrot.slane %v288, %v292
        %v311 = vunpack.c.l.b16 %v272
        %v312 = vunpack.c.l.b16 %v273
        %v313 = vunpack.c.l.b16 %v274
        %v314 = vunpack.c.l.b16 %v275
        %v315 = vunpack.c.l.b16 %v276
        %v316 = vunpack.c.l.b16 %v277
        %v317 = vunpack.c.l.b16 %v278
        %v318 = vunpack.c.l.b16 %v279
        %v319 = vunpack.c.l.b16 %v280
        %v320 = vunpack.c.l.b16 %v281
        %v321 = vunpack.c.l.b16 %v282
        %v322 = vunpack.c.l.b16 %v283
        %v323 = vunpack.c.l.b16 %v284
        %v324 = vunpack.c.l.b16 %v285
        %v325 = vunpack.c.l.b16 %v286
        %v326 = vunpack.c.l.b16 %v287
        %v327 = vpack.c.b16 %v312, %v311
        %v328 = vpack.c.b16 %v314, %v313
        %v329 = vpack.c.b16 %v316, %v315
        %v330 = vpack.c.b16 %v318, %v317
        %v331 = vpack.c.b16 %v320, %v319
        %v332 = vpack.c.b16 %v322, %v321
        %v333 = vpack.c.b16 %v324, %v323
        %v334 = vpack.c.b16 %v326, %v325
        %343 = vmatprep.subr.bf16.mxu0 0
        %344 = vmatpush1.bf16.msra.mxu0 %v327
        %345 = vmatprep.subr.bf16.mxu0 0
        %346 = vmatpush1.bf16.msra.mxu0 %v328
        %347 = vmatprep.subr.bf16.mxu0 0
        %348 = vmatpush1.bf16.msra.mxu0 %v329
        %349 = vmatprep.subr.bf16.mxu0 0
        %350 = vmatpush1.bf16.msra.mxu0 %v330
        %351 = vmatprep.subr.bf16.mxu0 0
        %352 = vmatpush1.bf16.msra.mxu0 %v331
        %353 = vmatprep.subr.bf16.mxu0 0
        %354 = vmatpush1.bf16.msra.mxu0 %v332
        %355 = vmatprep.subr.bf16.mxu0 0
        %356 = vmatpush1.bf16.msra.mxu0 %v333
        %357 = vmatprep.subr.bf16.mxu0 0
        %358 = vmatpush1.bf16.msra.mxu0 %v334
        %359 = vmatprep.subr.bf16.mxu0 0
        %360 = vmatpush1.bf16.msra.mxu0 0
        %361 = vmatprep.subr.bf16.mxu0 0
        %362 = vmatpush1.bf16.msra.mxu0 0
        %363 = vmatprep.subr.bf16.mxu0 0
        %364 = vmatpush1.bf16.msra.mxu0 0
        %365 = vmatprep.subr.bf16.mxu0 0
        %366 = vmatpush1.bf16.msra.mxu0 0
        %367 = vmatprep.subr.bf16.mxu0 0
        %368 = vmatpush1.bf16.msra.mxu0 0
        %369 = vmatprep.subr.bf16.mxu0 0
        %370 = vmatpush1.bf16.msra.mxu0 0
        %371 = vmatprep.subr.bf16.mxu0 0
        %372 = vmatpush1.bf16.msra.mxu0 0
        %373 = vmatprep.subr.bf16.mxu0 0
        %374 = vmatpush1.bf16.msra.mxu0 0
        %375 = vmatprep.mubr.bf16.mxu0 0
        %376 = vmatmul.mubr.bf16.gmra.mrb[0].mxu0 %v271
        %v377 = vpop.f32.mrb[0].mxu0
        %v378 = vadd.f32 %v293, %v377
        %v379 = vpop.f32.mrb[0].mxu0
        %v380 = vpop.f32.mrb[0].mxu0
        %v381 = vpop.f32.mrb[0].mxu0
        %382 = vdwg.mxu0
        %v383 = vmax.f32 %v378, 0.0
        %v384 = vpack.c.bf16 %v383, %v383
        %v385 = vld [vmem:[#allocation7] sm:$0xf]
        %v386 = vld [vmem:[#allocation7 + $0x4] sm:$0xf]
        %v387 = vld [vmem:[#allocation7 + $0x8] sm:$0xf]
        %v388 = vld [vmem:[#allocation7 + $0xc] sm:$0xf]
        %v389 = vld [vmem:[#allocation7 + $0x10] sm:$0xf]
        %v390 = vld [vmem:[#allocation7 + $0x14] sm:$0xf]
        %v391 = vld [vmem:[#allocation7 + $0x18] sm:$0xf]
        %v392 = vld [vmem:[#allocation7 + $0x1c] sm:$0xf]
        %v393 = vld [vmem:[#allocation7 + $0x20] sm:$0xf]
        %v394 = vld [vmem:[#allocation7 + $0x24] sm:$0xf]
        %v395 = vld [vmem:[#allocation7 + $0x28] sm:$0xf]
        %v396 = vld [vmem:[#allocation7 + $0x2c] sm:$0xf]
        %v397 = vld [vmem:[#allocation7 + $0x30] sm:$0xf]
        %v398 = vld [vmem:[#allocation7 + $0x34] sm:$0xf]
        %v399 = vld [vmem:[#allocation7 + $0x38] sm:$0xf]
        %v400 = vld [vmem:[#allocation7 + $0x3c] sm:$0xf]
        %v401 = vld [vmem:[%s4] sm:$0x1]
        %v403 = vlaneseq
        %v404 = vshrl.u32 %v403, 7
        %v405 = vsub.s32 0, %v404
        %v406 = vrot.slane %v401, %v405
        %v424 = vunpack.c.l.b16 %v385
        %v425 = vunpack.c.l.b16 %v386
        %v426 = vunpack.c.l.b16 %v387
        %v427 = vunpack.c.l.b16 %v388
        %v428 = vunpack.c.l.b16 %v389
        %v429 = vunpack.c.l.b16 %v390
        %v430 = vunpack.c.l.b16 %v391
        %v431 = vunpack.c.l.b16 %v392
        %v432 = vunpack.c.l.b16 %v393
        %v433 = vunpack.c.l.b16 %v394
        %v434 = vunpack.c.l.b16 %v395
        %v435 = vunpack.c.l.b16 %v396
        %v436 = vunpack.c.l.b16 %v397
        %v437 = vunpack.c.l.b16 %v398
        %v438 = vunpack.c.l.b16 %v399
        %v439 = vunpack.c.l.b16 %v400
        %v440 = vpack.c.b16 %v425, %v424
        %v441 = vpack.c.b16 %v427, %v426
        %v442 = vpack.c.b16 %v429, %v428
        %v443 = vpack.c.b16 %v431, %v430
        %v444 = vpack.c.b16 %v433, %v432
        %v445 = vpack.c.b16 %v435, %v434
        %v446 = vpack.c.b16 %v437, %v436
        %v447 = vpack.c.b16 %v439, %v438
        %456 = vmatprep.subr.bf16.mxu0 0
        %457 = vmatpush1.bf16.msra.mxu0 %v440
        %458 = vmatprep.subr.bf16.mxu0 0
        %459 = vmatpush1.bf16.msra.mxu0 %v441
        %460 = vmatprep.subr.bf16.mxu0 0
        %461 = vmatpush1.bf16.msra.mxu0 %v442
        %462 = vmatprep.subr.bf16.mxu0 0
        %463 = vmatpush1.bf16.msra.mxu0 %v443
        %464 = vmatprep.subr.bf16.mxu0 0
        %465 = vmatpush1.bf16.msra.mxu0 %v444
        %466 = vmatprep.subr.bf16.mxu0 0
        %467 = vmatpush1.bf16.msra.mxu0 %v445
        %468 = vmatprep.subr.bf16.mxu0 0
        %469 = vmatpush1.bf16.msra.mxu0 %v446
        %470 = vmatprep.subr.bf16.mxu0 0
        %471 = vmatpush1.bf16.msra.mxu0 %v447
        %472 = vmatprep.subr.bf16.mxu0 0
        %473 = vmatpush1.bf16.msra.mxu0 0
        %474 = vmatprep.subr.bf16.mxu0 0
        %475 = vmatpush1.bf16.msra.mxu0 0
        %476 = vmatprep.subr.bf16.mxu0 0
        %477 = vmatpush1.bf16.msra.mxu0 0
        %478 = vmatprep.subr.bf16.mxu0 0
        %479 = vmatpush1.bf16.msra.mxu0 0
        %480 = vmatprep.subr.bf16.mxu0 0
        %481 = vmatpush1.bf16.msra.mxu0 0
        %482 = vmatprep.subr.bf16.mxu0 0
        %483 = vmatpush1.bf16.msra.mxu0 0
        %484 = vmatprep.subr.bf16.mxu0 0
        %485 = vmatpush1.bf16.msra.mxu0 0
        %486 = vmatprep.subr.bf16.mxu0 0
        %487 = vmatpush1.bf16.msra.mxu0 0
        %488 = vmatprep.mubr.bf16.mxu0 0
        %489 = vmatmul.mubr.bf16.gmra.mrb[0].mxu0 %v384
        %v490 = vpop.f32.mrb[0].mxu0
        %v491 = vadd.f32 %v406, %v490
        %v492 = vpop.f32.mrb[0].mxu0
        %v493 = vpop.f32.mrb[0].mxu0
        %v494 = vpop.f32.mrb[0].mxu0
        %495 = vdwg.mxu0
        %v496 = vadd.f32 %v491, %v270
        %497 = vst [vmem:[%s268] sm:$0xff] %v496
        %s498 = sand.u32 %s141, 1
        %s499 = scalar_lea.sflag [#allocation4], %s498
        %s500 = sand.u32 %s141, 1
        %s501 = smul.addr %s500, 8
        %s502 = scalar_lea.vmem [#allocation8], %s501
        // Predicated region
        $region53: #{tpu_custom_call.1} parent=39 // pred_check
          %p503 = pneg %p151
        $region54: #{tpu_custom_call.1} parent=39 // pred_check_branch
          %505 = sbr.rel (%p503) target = $region56
        $region55: #{tpu_custom_call.1} parent=39 // pred_region
          %s507 = ssub.s32 128, 128
          %508 = vsyncadd %s499, %s507
          %s509 = smul.addr %s23, 128
          %s510 = scalar_lea.hbm %s5, %s509
          %s512 = sshll.u32 %s502, 4
          %s513 = int_to_ptr.vmem [resolvable:$true] %s512
          %515 = dma.vmem_to_hbm [thread:$0]  %s513, 128, %s510, %s499
        $region56: #{tpu_custom_call.1} parent=39 // pred_fallthru
          _
      $region40: #{tpu_custom_call.1} parent=5 // pred_fallthru
        _
      %p516 = scmp.le.s32.totalorder 2, %s18
      // Predicated region
      $region57: #{tpu_custom_call.1} parent=5 // pred_check
        %p517 = pneg %p516
      $region58: #{tpu_custom_call.1} parent=5 // pred_check_branch
        %519 = sbr.rel (%p517) target = $region60
      $region59: #{tpu_custom_call.1} parent=5 // pred_region
        %s520 = ssub.s32 %s18, 2
        // Predicated region
        $region61: #{tpu_custom_call.1} parent=59 // pred_check
          %p521 = pneg %p157
        $region62: #{tpu_custom_call.1} parent=59 // pred_check_branch
          %523 = sbr.rel (%p521) target = $region64
        $region63: #{tpu_custom_call.1} parent=59 // pred_region
          %s524 = sand.u32 %s142, 1
          %s525 = scalar_lea.sflag [#allocation4], %s524
          %s526 = sand.u32 %s142, 1
          %s527 = smul.addr %s526, 8
          %s528 = scalar_lea.vmem [#allocation8], %s527
          %529 = dma.done %s525, 128
        $region64: #{tpu_custom_call.1} parent=59 // pred_fallthru
          _
      $region60: #{tpu_custom_call.1} parent=5 // pred_fallthru
        _
    $region6: #{tpu_custom_call.1} parent=1 // loop_footer
      %s22 = sadd.s32 1, %s18
    $region7: #{tpu_custom_call.1} parent=1 // loop_footer_branch
      %17 = sbr.rel target = $region3
    $region8: #{tpu_custom_call.1} parent=1 // loop_exit
      _
    %530 = vsyncpa [#allocation3], 1
    %s531 = scalar_lea.sflag [#allocation3], 1
    %532 = vsyncpa %s531, 1
    %533 = vsyncpa [#allocation6], 1
    %534 = vsyncpa [#allocation4], 1
    %s535 = scalar_lea.sflag [#allocation4], 1
    %536 = vsyncpa %s535, 1

</llo_original>
